<compile_context>
chip_gen: v6e
topology: v6e:2x2x1
jax: 0.10.0
libtpu: 0.0.40
codegen_flags: <defaults>
</compile_context>

<pallas_src>
import jax
import jax.numpy as jnp
from jax.experimental import pallas as pl
from jax.experimental.pallas import tpu as pltpu

OUT_PAD = 128  # lane-dense output width (multiple of 128 -> unmasked vst)


def _round_up(x, m):
    return ((x + m - 1) // m) * m


def make_critic_kernel(n_chunks, n_layers, activation="relu"):
    """Build a kernel for n_chunks input chunks and n_layers linear layers."""
    if activation == "relu":
        act = lambda v: jnp.maximum(v, 0.0)
    elif activation == "tanh":
        act = jnp.tanh
    else:
        raise ValueError(f"unsupported activation: {activation}")
    # TODO(synk): only relu/tanh activation modules are translated; arbitrary
    # torch activation modules are not mapped.

    def kernel(*refs):
        idx = 0
        chunk_refs = refs[idx:idx + n_chunks]; idx += n_chunks
        w1_refs = refs[idx:idx + n_chunks]; idx += n_chunks
        b1_ref = refs[idx]; idx += 1

        # layer 1: torch.cat fused as a sum of per-chunk matmuls on W1
        # row-slices (equivalent to concat(x) @ W1).
        h = jnp.dot(chunk_refs[0][...], w1_refs[0][...],
                    preferred_element_type=jnp.float32)
        for c in range(1, n_chunks):
            h = h + jnp.dot(chunk_refs[c][...], w1_refs[c][...],
                            preferred_element_type=jnp.float32)
        h = act(h + b1_ref[...])

        # remaining layers (last one: Identity activation, lane-padded width).
        for layer in range(1, n_layers):
            w_ref, b_ref = refs[idx], refs[idx + 1]; idx += 2
            h = jnp.dot(h, w_ref[...], preferred_element_type=jnp.float32)
            h = h + b_ref[...]
            if layer < n_layers - 1:
                h = act(h)

        o_ref = refs[idx]
        o_ref[...] = h.astype(o_ref.dtype)

    return kernel


def critic_forward(obs_list, act_list, params, obs_dims, act_dims,
                   *, activation="relu", tile_b=512):
    """Pallas equivalent of Critic.forward(obs_list, act_list)."""
    chunk_dims = list(obs_dims) + list(act_dims)
    chunks = [obs_list[i].reshape(-1, obs_dims[i]).astype(jnp.float32)
              for i in range(len(obs_dims))]
    chunks += [act_list[i].reshape(-1, act_dims[i]).astype(jnp.float32)
               for i in range(len(act_dims))]
    B = chunks[0].shape[0]

    # Batch tile: multiple of 8 (f32 sublane). No input padding needed --
    # Pallas masks the ragged last block on both input and output.
    TB = max(8, min(_round_up(tile_b, 8), _round_up(B, 8)))
    n_tiles = pl.cdiv(B, TB)

    layers = [(params[2 * j], params[2 * j + 1]) for j in range(len(params) // 2)]
    n_layers = len(layers)
    assert n_layers >= 2, "expects at least one hidden layer"

    # --- split W1 rows per input chunk (fuses torch.cat into the kernel) ----
    w1, b1 = layers[0]
    w1_chunks, off = [], 0
    for d in chunk_dims:
        w1_chunks.append(w1[off:off + d, :])
        off += d

    # --- lane-dense output layer: zero-pad width 1 -> OUT_PAD lanes ---------
    w_out, b_out = layers[-1]
    w_out_p = jnp.pad(w_out, ((0, 0), (0, OUT_PAD - w_out.shape[1])))
    b_out_p = jnp.pad(b_out, ((0, 0), (0, OUT_PAD - b_out.shape[1])))
    mid_layers = layers[1:-1]

    operands = list(chunks) + list(w1_chunks) + [b1]
    for w, b in mid_layers:
        operands += [w, b]
    operands += [w_out_p, b_out_p]

    batch_spec = lambda d: pl.BlockSpec((TB, d), lambda i: (i, 0))
    const_spec = lambda a: pl.BlockSpec(a.shape, lambda i: (0,) * a.ndim)

    in_specs = [batch_spec(d) for d in chunk_dims]
    in_specs += [const_spec(w) for w in w1_chunks]
    in_specs += [const_spec(b1)]
    for w, b in mid_layers:
        in_specs += [const_spec(w), const_spec(b)]
    in_specs += [const_spec(w_out_p), const_spec(b_out_p)]

    # advisory cost estimate so XLA can schedule around this small kernel
    D = sum(chunk_dims)
    B_eff = int(n_tiles) * TB
    weight_ops = list(w1_chunks) + [w for w, _ in mid_layers] + [w_out_p]
    flops = 2 * B_eff * sum(int(w.shape[0]) * int(w.shape[1]) for w in weight_ops)
    param_bytes = 4 * sum(int(o.size) for o in operands[len(chunks):])
    bytes_accessed = 4 * B * (D + OUT_PAD) + param_bytes

    q_pad = pl.pallas_call(
        make_critic_kernel(len(chunk_dims), n_layers, activation),
        out_shape=jax.ShapeDtypeStruct((B, OUT_PAD), jnp.float32),
        grid=(n_tiles,),
        in_specs=in_specs,
        out_specs=pl.BlockSpec((TB, OUT_PAD), lambda i: (i, 0)),
        compiler_params=pltpu.CompilerParams(
            dimension_semantics=("parallel",)),
        cost_estimate=pl.CostEstimate(
            flops=flops, transcendentals=0, bytes_accessed=bytes_accessed),
    )(*operands)

    # torch.squeeze(q, -1): keep real column 0 only
    return q_pad[:, 0]


def init_params(key, input_dim, hidden_sizes):
    """Deterministic init mimicking nn.Linear (uniform +-1/sqrt(fan_in))."""
    sizes = [input_dim] + list(hidden_sizes) + [1]
    params = []
    for j in range(len(sizes) - 1):
        fan_in, fan_out = sizes[j], sizes[j + 1]
        key, kw, kb = jax.random.split(key, 3)
        bound = 1.0 / jnp.sqrt(fan_in)
        w = jax.random.uniform(kw, (fan_in, fan_out), jnp.float32, -bound, bound)
        b = jax.random.uniform(kb, (1, fan_out), jnp.float32, -bound, bound)
        params += [w, b]
    return tuple(params)


if __name__ == "__main__":
    # Small MADDPG-style setup: 2 agents.
    obs_dims = [10, 12]
    act_dims = [4, 3]
    hidden_sizes = [32, 32]  # activation = ReLU
    batch = 8

    key = jax.random.PRNGKey(0)
    key, *ks = jax.random.split(key, 1 + len(obs_dims) + len(act_dims))
    obs_list = [jax.random.normal(ks[i], (batch, obs_dims[i]), jnp.float32)
                for i in range(len(obs_dims))]
    act_list = [jax.random.normal(ks[len(obs_dims) + i], (batch, act_dims[i]),
                                  jnp.float32)
                for i in range(len(act_dims))]

    input_dim = sum(obs_dims) + sum(act_dims)
    params = init_params(jax.random.PRNGKey(42), input_dim, hidden_sizes)

    def reference(o_list, a_list, ps):
        x = jnp.concatenate(
            [o.reshape(-1, d) for o, d in zip(o_list, obs_dims)]
            + [a.reshape(-1, d) for a, d in zip(a_list, act_dims)], axis=-1)
        h = x
        for j in range(0, len(ps) - 2, 2):
            h = jnp.maximum(h @ ps[j] + ps[j + 1], 0.0)
        return jnp.squeeze(h @ ps[-2] + ps[-1], -1)

    # case 1: tiny batch (single tile, exact fit)
    q = jax.block_until_ready(
        critic_forward(obs_list, act_list, params, obs_dims, act_dims))
    q_ref = reference(obs_list, act_list, params)
    assert q.shape == (batch,)
    assert jnp.allclose(q, q_ref, atol=1e-5, rtol=1e-5)

    # case 2: batch > tile and not a multiple of 8 (ragged last block)
    big_batch = 300
    key, *kb = jax.random.split(key, 1 + len(obs_dims) + len(act_dims))
    obs_big = [jax.random.normal(kb[i], (big_batch, obs_dims[i]), jnp.float32)
               for i in range(len(obs_dims))]
    act_big = [jax.random.normal(kb[len(obs_dims) + i], (big_batch, act_dims[i]),
                                 jnp.float32)
               for i in range(len(act_dims))]
    q_big = jax.block_until_ready(
        critic_forward(obs_big, act_big, params, obs_dims, act_dims,
                       tile_b=256))
    q_big_ref = reference(obs_big, act_big, params)
    assert q_big.shape == (big_batch,)
    assert jnp.allclose(q_big, q_big_ref, atol=1e-4, rtol=1e-4)

    # case 3: batch smaller than the minimum 8-row tile
    tiny_batch = 5
    key, *kt = jax.random.split(key, 1 + len(obs_dims) + len(act_dims))
    obs_tiny = [jax.random.normal(kt[i], (tiny_batch, obs_dims[i]), jnp.float32)
                for i in range(len(obs_dims))]
    act_tiny = [jax.random.normal(kt[len(obs_dims) + i],
                                  (tiny_batch, act_dims[i]), jnp.float32)
                for i in range(len(act_dims))]
    q_tiny = jax.block_until_ready(
        critic_forward(obs_tiny, act_tiny, params, obs_dims, act_dims))
    q_tiny_ref = reference(obs_tiny, act_tiny, params)
    assert q_tiny.shape == (tiny_batch,)
    assert jnp.allclose(q_tiny, q_tiny_ref, atol=1e-5, rtol=1e-5)

    print("KERNEL_OK")
</pallas_src>

<mosaic_0001>
module attributes {stable_mosaic.version = 11 : i64} {
  func.func @kernel(%arg0: i32, %arg1: memref<8x10xf32, #tpu.memory_space<vmem>>, %arg2: memref<8x12xf32, #tpu.memory_space<vmem>>, %arg3: memref<8x4xf32, #tpu.memory_space<vmem>>, %arg4: memref<8x3xf32, #tpu.memory_space<vmem>>, %arg5: memref<10x32xf32, #tpu.memory_space<vmem>>, %arg6: memref<12x32xf32, #tpu.memory_space<vmem>>, %arg7: memref<4x32xf32, #tpu.memory_space<vmem>>, %arg8: memref<3x32xf32, #tpu.memory_space<vmem>>, %arg9: memref<1x32xf32, #tpu.memory_space<vmem>>, %arg10: memref<32x32xf32, #tpu.memory_space<vmem>>, %arg11: memref<1x32xf32, #tpu.memory_space<vmem>>, %arg12: memref<32x128xf32, #tpu.memory_space<vmem>>, %arg13: memref<1x128xf32, #tpu.memory_space<vmem>>, %arg14: memref<8x128xf32, #tpu.memory_space<vmem>>) attributes {dimension_semantics = [#tpu.dimension_semantics<parallel>], iteration_bounds = array<i64: 1>, scalar_prefetch = 0 : i64, scratch_operands = 0 : i64, tpu.core_type = #tpu.core_type<tc>, window_params = [{transform_indices = @transform_0, window_bounds = array<i64: 8, 10>}, {transform_indices = @transform_1, window_bounds = array<i64: 8, 12>}, {transform_indices = @transform_2, window_bounds = array<i64: 8, 4>}, {transform_indices = @transform_3, window_bounds = array<i64: 8, 3>}, {pipeline_mode = #tpu.pipeline_mode<synchronous>, transform_indices = @transform_4, window_bounds = array<i64: 10, 32>}, {pipeline_mode = #tpu.pipeline_mode<synchronous>, transform_indices = @transform_5, window_bounds = array<i64: 12, 32>}, {pipeline_mode = #tpu.pipeline_mode<synchronous>, transform_indices = @transform_6, window_bounds = array<i64: 4, 32>}, {pipeline_mode = #tpu.pipeline_mode<synchronous>, transform_indices = @transform_7, window_bounds = array<i64: 3, 32>}, {pipeline_mode = #tpu.pipeline_mode<synchronous>, transform_indices = @transform_8, window_bounds = array<i64: 1, 32>}, {pipeline_mode = #tpu.pipeline_mode<synchronous>, transform_indices = @transform_9, window_bounds = array<i64: 32, 32>}, {pipeline_mode = #tpu.pipeline_mode<synchronous>, transform_indices = @transform_10, window_bounds = array<i64: 1, 32>}, {pipeline_mode = #tpu.pipeline_mode<synchronous>, transform_indices = @transform_11, window_bounds = array<i64: 32, 128>}, {pipeline_mode = #tpu.pipeline_mode<synchronous>, transform_indices = @transform_12, window_bounds = array<i64: 1, 128>}, {transform_indices = @transform_13, window_bounds = array<i64: 8, 128>}]} {
    %c0 = arith.constant 0 : index
    %c0_0 = arith.constant 0 : index
    %0 = vector.load %arg1[%c0, %c0_0] : memref<8x10xf32, #tpu.memory_space<vmem>>, vector<8x10xf32>
    %c0_1 = arith.constant 0 : index
    %c0_2 = arith.constant 0 : index
    %1 = vector.load %arg5[%c0_1, %c0_2] : memref<10x32xf32, #tpu.memory_space<vmem>>, vector<10x32xf32>
    %cst = arith.constant dense<0.000000e+00> : vector<8x32xf32>
    %2 = tpu.matmul %0, %1, %cst {dimension_numbers = #tpu.dot_dimension_numbers<[1], [0], [0], [1], [0, 0, 1, 1], [], []>} : vector<8x10xf32>, vector<10x32xf32>, vector<8x32xf32> -> vector<8x32xf32>
    %c0_3 = arith.constant 0 : index
    %c0_4 = arith.constant 0 : index
    %3 = vector.load %arg2[%c0_3, %c0_4] : memref<8x12xf32, #tpu.memory_space<vmem>>, vector<8x12xf32>
    %c0_5 = arith.constant 0 : index
    %c0_6 = arith.constant 0 : index
    %4 = vector.load %arg6[%c0_5, %c0_6] : memref<12x32xf32, #tpu.memory_space<vmem>>, vector<12x32xf32>
    %cst_7 = arith.constant dense<0.000000e+00> : vector<8x32xf32>
    %5 = tpu.matmul %3, %4, %cst_7 {dimension_numbers = #tpu.dot_dimension_numbers<[1], [0], [0], [1], [0, 0, 1, 1], [], []>} : vector<8x12xf32>, vector<12x32xf32>, vector<8x32xf32> -> vector<8x32xf32>
    %6 = arith.addf %2, %5 : vector<8x32xf32>
    %c0_8 = arith.constant 0 : index
    %c0_9 = arith.constant 0 : index
    %7 = vector.load %arg3[%c0_8, %c0_9] : memref<8x4xf32, #tpu.memory_space<vmem>>, vector<8x4xf32>
    %c0_10 = arith.constant 0 : index
    %c0_11 = arith.constant 0 : index
    %8 = vector.load %arg7[%c0_10, %c0_11] : memref<4x32xf32, #tpu.memory_space<vmem>>, vector<4x32xf32>
    %cst_12 = arith.constant dense<0.000000e+00> : vector<8x32xf32>
    %9 = tpu.matmul %7, %8, %cst_12 {dimension_numbers = #tpu.dot_dimension_numbers<[1], [0], [0], [1], [0, 0, 1, 1], [], []>} : vector<8x4xf32>, vector<4x32xf32>, vector<8x32xf32> -> vector<8x32xf32>
    %10 = arith.addf %6, %9 : vector<8x32xf32>
    %c0_13 = arith.constant 0 : index
    %c0_14 = arith.constant 0 : index
    %11 = vector.load %arg4[%c0_13, %c0_14] : memref<8x3xf32, #tpu.memory_space<vmem>>, vector<8x3xf32>
    %c0_15 = arith.constant 0 : index
    %c0_16 = arith.constant 0 : index
    %12 = vector.load %arg8[%c0_15, %c0_16] : memref<3x32xf32, #tpu.memory_space<vmem>>, vector<3x32xf32>
    %cst_17 = arith.constant dense<0.000000e+00> : vector<8x32xf32>
    %13 = tpu.matmul %11, %12, %cst_17 {dimension_numbers = #tpu.dot_dimension_numbers<[1], [0], [0], [1], [0, 0, 1, 1], [], []>} : vector<8x3xf32>, vector<3x32xf32>, vector<8x32xf32> -> vector<8x32xf32>
    %14 = arith.addf %10, %13 : vector<8x32xf32>
    %c0_18 = arith.constant 0 : index
    %c0_19 = arith.constant 0 : index
    %15 = vector.load %arg9[%c0_18, %c0_19] : memref<1x32xf32, #tpu.memory_space<vmem>>, vector<1x32xf32>
    %16 = vector.broadcast %15 : vector<1x32xf32> to vector<8x32xf32>
    %17 = arith.addf %14, %16 : vector<8x32xf32>
    %cst_20 = arith.constant 0.000000e+00 : f32
    %18 = vector.broadcast %cst_20 : f32 to vector<8x32xf32>
    %19 = arith.maximumf %17, %18 : vector<8x32xf32>
    %c0_21 = arith.constant 0 : index
    %c0_22 = arith.constant 0 : index
    %20 = vector.load %arg10[%c0_21, %c0_22] : memref<32x32xf32, #tpu.memory_space<vmem>>, vector<32x32xf32>
    %cst_23 = arith.constant dense<0.000000e+00> : vector<8x32xf32>
    %21 = tpu.matmul %19, %20, %cst_23 {dimension_numbers = #tpu.dot_dimension_numbers<[1], [0], [0], [1], [0, 0, 1, 1], [], []>} : vector<8x32xf32>, vector<32x32xf32>, vector<8x32xf32> -> vector<8x32xf32>
    %c0_24 = arith.constant 0 : index
    %c0_25 = arith.constant 0 : index
    %22 = vector.load %arg11[%c0_24, %c0_25] : memref<1x32xf32, #tpu.memory_space<vmem>>, vector<1x32xf32>
    %23 = vector.broadcast %22 : vector<1x32xf32> to vector<8x32xf32>
    %24 = arith.addf %21, %23 : vector<8x32xf32>
    %cst_26 = arith.constant 0.000000e+00 : f32
    %25 = vector.broadcast %cst_26 : f32 to vector<8x32xf32>
    %26 = arith.maximumf %24, %25 : vector<8x32xf32>
    %c0_27 = arith.constant 0 : index
    %c0_28 = arith.constant 0 : index
    %27 = vector.load %arg12[%c0_27, %c0_28] : memref<32x128xf32, #tpu.memory_space<vmem>>, vector<32x128xf32>
    %cst_29 = arith.constant dense<0.000000e+00> : vector<8x128xf32>
    %28 = tpu.matmul %26, %27, %cst_29 {dimension_numbers = #tpu.dot_dimension_numbers<[1], [0], [0], [1], [0, 0, 1, 1], [], []>} : vector<8x32xf32>, vector<32x128xf32>, vector<8x128xf32> -> vector<8x128xf32>
    %c0_30 = arith.constant 0 : index
    %c0_31 = arith.constant 0 : index
    %29 = vector.load %arg13[%c0_30, %c0_31] : memref<1x128xf32, #tpu.memory_space<vmem>>, vector<1x128xf32>
    %30 = vector.broadcast %29 : vector<1x128xf32> to vector<8x128xf32>
    %31 = arith.addf %28, %30 : vector<8x128xf32>
    %c0_32 = arith.constant 0 : index
    %c0_33 = arith.constant 0 : index
    %32 = vector.load %arg14[%c0_32, %c0_33] : memref<8x128xf32, #tpu.memory_space<vmem>>, vector<8x128xf32>
    tpu.vector_store %arg14[%c0_32, %c0_33], %31 {strides = array<i32>} : memref<8x128xf32, #tpu.memory_space<vmem>>, vector<8x128xf32>,
    return
  }
  func.func @transform_0(%arg0: i32) -> (i32, i32) {
    %c0_i32 = arith.constant 0 : i32
    %c0_i32_0 = arith.constant 0 : i32
    return %arg0, %c0_i32 : i32, i32
  }
  func.func @transform_1(%arg0: i32) -> (i32, i32) {
    %c0_i32 = arith.constant 0 : i32
    %c0_i32_0 = arith.constant 0 : i32
    return %arg0, %c0_i32 : i32, i32
  }
  func.func @transform_2(%arg0: i32) -> (i32, i32) {
    %c0_i32 = arith.constant 0 : i32
    %c0_i32_0 = arith.constant 0 : i32
    return %arg0, %c0_i32 : i32, i32
  }
  func.func @transform_3(%arg0: i32) -> (i32, i32) {
    %c0_i32 = arith.constant 0 : i32
    %c0_i32_0 = arith.constant 0 : i32
    return %arg0, %c0_i32 : i32, i32
  }
  func.func @transform_4(%arg0: i32) -> (i32, i32) {
    %c0_i32 = arith.constant 0 : i32
    %c0_i32_0 = arith.constant 0 : i32
    %c0_i32_1 = arith.constant 0 : i32
    return %c0_i32, %c0_i32_0 : i32, i32
  }
  func.func @transform_5(%arg0: i32) -> (i32, i32) {
    %c0_i32 = arith.constant 0 : i32
    %c0_i32_0 = arith.constant 0 : i32
    %c0_i32_1 = arith.constant 0 : i32
    return %c0_i32, %c0_i32_0 : i32, i32
  }
  func.func @transform_6(%arg0: i32) -> (i32, i32) {
    %c0_i32 = arith.constant 0 : i32
    %c0_i32_0 = arith.constant 0 : i32
    %c0_i32_1 = arith.constant 0 : i32
    return %c0_i32, %c0_i32_0 : i32, i32
  }
  func.func @transform_7(%arg0: i32) -> (i32, i32) {
    %c0_i32 = arith.constant 0 : i32
    %c0_i32_0 = arith.constant 0 : i32
    %c0_i32_1 = arith.constant 0 : i32
    return %c0_i32, %c0_i32_0 : i32, i32
  }
  func.func @transform_8(%arg0: i32) -> (i32, i32) {
    %c0_i32 = arith.constant 0 : i32
    %c0_i32_0 = arith.constant 0 : i32
    %c0_i32_1 = arith.constant 0 : i32
    return %c0_i32, %c0_i32_0 : i32, i32
  }
  func.func @transform_9(%arg0: i32) -> (i32, i32) {
    %c0_i32 = arith.constant 0 : i32
    %c0_i32_0 = arith.constant 0 : i32
    %c0_i32_1 = arith.constant 0 : i32
    return %c0_i32, %c0_i32_0 : i32, i32
  }
  func.func @transform_10(%arg0: i32) -> (i32, i32) {
    %c0_i32 = arith.constant 0 : i32
    %c0_i32_0 = arith.constant 0 : i32
    %c0_i32_1 = arith.constant 0 : i32
    return %c0_i32, %c0_i32_0 : i32, i32
  }
  func.func @transform_11(%arg0: i32) -> (i32, i32) {
    %c0_i32 = arith.constant 0 : i32
    %c0_i32_0 = arith.constant 0 : i32
    %c0_i32_1 = arith.constant 0 : i32
    return %c0_i32, %c0_i32_0 : i32, i32
  }
  func.func @transform_12(%arg0: i32) -> (i32, i32) {
    %c0_i32 = arith.constant 0 : i32
    %c0_i32_0 = arith.constant 0 : i32
    %c0_i32_1 = arith.constant 0 : i32
    return %c0_i32, %c0_i32_0 : i32, i32
  }
  func.func @transform_13(%arg0: i32) -> (i32, i32) {
    %c0_i32 = arith.constant 0 : i32
    %c0_i32_0 = arith.constant 0 : i32
    return %arg0, %c0_i32 : i32, i32
  }
}

</mosaic_0001>

<llo_original>
// kernel: tpu_custom_call.1
$region0: #{tpu_custom_call.1}
  #allocation0 [shape = 'u32[]', space=smem, size = 0x4, offset = 0x4, fixed_abs, tag = 'smem constant byte address 0x4 - core index']
  #allocation1 [shape = 'u32[144,128]{1,0:T(1,128)}', space=vmem, size = 0x12000, scoped, tag = 'internal scratch']
  %s0 = inlined_call_operand.vmem [shape: f32[8,10], index: 0, kind: input, shape index: {}]
  %s1 = inlined_call_operand.hbm [shape: f32[8,12], index: 1, kind: input, shape index: {}]
  %s2 = inlined_call_operand.vmem [shape: f32[8,4], index: 2, kind: input, shape index: {}]
  %s3 = inlined_call_operand.vmem [shape: f32[8,3], index: 3, kind: input, shape index: {}]
  %s4 = inlined_call_operand.hbm [shape: f32[10,32], index: 4, kind: input, shape index: {}]
  %s5 = inlined_call_operand.hbm [shape: f32[12,32], index: 5, kind: input, shape index: {}]
  %s6 = inlined_call_operand.hbm [shape: f32[4,32], index: 6, kind: input, shape index: {}]
  %s7 = inlined_call_operand.hbm [shape: f32[3,32], index: 7, kind: input, shape index: {}]
  %s8 = inlined_call_operand.hbm [shape: f32[1,32], index: 8, kind: input, shape index: {}]
  %s9 = inlined_call_operand.vmem [shape: f32[32,32], index: 9, kind: input, shape index: {}]
  %s10 = inlined_call_operand.vmem [shape: f32[1,32], index: 10, kind: input, shape index: {}]
  %s11 = inlined_call_operand.hbm [shape: f32[32,128], index: 11, kind: input, shape index: {}]
  %s12 = inlined_call_operand.vmem [shape: f32[1,128], index: 12, kind: input, shape index: {}]
  %s13 = inlined_call_operand.hbm [shape: f32[8,128], index: 13, kind: output, shape index: {}]
  %s14 = sld [smem:[#allocation0]]
  $region90: #{tpu_custom_call.1} parent=0
    _
  %s16 = ssub.s32 1, %s14
  %s17 = scalar_select 0, %s16, %s14
  $region1: #{tpu_custom_call.1} parent=0
    #allocation2 [shape = 'u8[4096]{0}', space=vmem, size = 0x1000, scoped, tag = 'input window, operand 1, single buffered']
    #allocation3 [shape = 's32[1]{0}', space=sflag, size = 0x4, scoped, tag = 'scoped memory for tpu_custom_call.1']
    #allocation4 [shape = 's32[1]{0}', space=sflag, size = 0x4, scoped, tag = 'scoped memory for tpu_custom_call.1']
    #allocation5 [shape = 'u8[8192]{0}', space=vmem, size = 0x2000, scoped, tag = 'input window, operand 4, single buffered']
    #allocation6 [shape = 's32[1]{0}', space=sflag, size = 0x4, scoped, tag = 'scoped memory for tpu_custom_call.1']
    #allocation7 [shape = 'u8[8192]{0}', space=vmem, size = 0x2000, scoped, tag = 'input window, operand 5, single buffered']
    #allocation8 [shape = 'u8[2048]{0}', space=vmem, size = 0x800, scoped, tag = 'input window, operand 6, single buffered']
    #allocation9 [shape = 's32[1]{0}', space=sflag, size = 0x4, scoped, tag = 'scoped memory for tpu_custom_call.1']
    #allocation10 [shape = 'u8[2048]{0}', space=vmem, size = 0x800, scoped, tag = 'input window, operand 7, single buffered']
    #allocation11 [shape = 'u8[512]{0}', space=vmem, size = 0x400, scoped, tag = 'input window, operand 8, single buffered']
    #allocation12 [shape = 's32[1]{0}', space=sflag, size = 0x4, scoped, tag = 'scoped memory for tpu_custom_call.1']
    #allocation13 [shape = 'u8[16384]{0}', space=vmem, size = 0x4000, scoped, tag = 'input window, operand 11, single buffered']
    #allocation14 [shape = 'u8[4096]{0}', space=vmem, size = 0x1000, scoped, tag = 'output window, operand 0, single buffered']
    %18 = vsyncpa [#allocation3], 0
    %19 = vsyncpa [#allocation6], 0
    %20 = vsyncpa [#allocation9], 0
    %21 = vsyncpa [#allocation12], 0
    %22 = vsyncpa [#allocation4], 0
    // Predicated region
    $region2: #{tpu_custom_call.1} parent=1 // pred_check
      _
    $region3: #{tpu_custom_call.1} parent=1 // pred_check_branch
      %24 = sbr.rel (0) target = $region5
    $region4: #{tpu_custom_call.1} parent=1 // pred_region
      _
    $region5: #{tpu_custom_call.1} parent=1 // pred_fallthru
      _
    // Predicated region
    $region6: #{tpu_custom_call.1} parent=1 // pred_check
      _
    $region7: #{tpu_custom_call.1} parent=1 // pred_check_branch
      %26 = sbr.rel (0) target = $region9
    $region8: #{tpu_custom_call.1} parent=1 // pred_region
      %s28 = ssub.s32 128, 128
      %29 = vsyncadd [#allocation3], %s28
      %s31 = sshll.u32 [#allocation2], 4
      %s32 = int_to_ptr.vmem [resolvable:$true] %s31
      %34 = dma.hbm_to_vmem [thread:$0]  %s1, 128, %s32, [#allocation3]
    $region9: #{tpu_custom_call.1} parent=1 // pred_fallthru
      _
    // Predicated region
    $region10: #{tpu_custom_call.1} parent=1 // pred_check
      _
    $region11: #{tpu_custom_call.1} parent=1 // pred_check_branch
      %36 = sbr.rel (0) target = $region13
    $region12: #{tpu_custom_call.1} parent=1 // pred_region
      _
    $region13: #{tpu_custom_call.1} parent=1 // pred_fallthru
      _
    // Predicated region
    $region14: #{tpu_custom_call.1} parent=1 // pred_check
      _
    $region15: #{tpu_custom_call.1} parent=1 // pred_check_branch
      %38 = sbr.rel (0) target = $region17
    $region16: #{tpu_custom_call.1} parent=1 // pred_region
      _
    $region17: #{tpu_custom_call.1} parent=1 // pred_fallthru
      _
    // Predicated region
    $region18: #{tpu_custom_call.1} parent=1 // pred_check
      _
    $region19: #{tpu_custom_call.1} parent=1 // pred_check_branch
      %40 = sbr.rel (0) target = $region21
    $region20: #{tpu_custom_call.1} parent=1 // pred_region
      %s42 = ssub.s32 256, 256
      %43 = vsyncadd [#allocation6], %s42
      %s44 = sshll.u32 [#allocation5], 4
      %s45 = int_to_ptr.vmem [resolvable:$true] %s44
      %50 = dma.hbm_to_vmem [thread:$0]  %s4, 256, %s45, [#allocation6], 128, 128, 8
    $region21: #{tpu_custom_call.1} parent=1 // pred_fallthru
      _
    // Predicated region
    $region22: #{tpu_custom_call.1} parent=1 // pred_check
      _
    $region23: #{tpu_custom_call.1} parent=1 // pred_check_branch
      %52 = sbr.rel (0) target = $region25
    $region24: #{tpu_custom_call.1} parent=1 // pred_region
      %s54 = ssub.s32 256, 256
      %55 = vsyncadd [#allocation6], %s54
      %s56 = sshll.u32 [#allocation7], 4
      %s57 = int_to_ptr.vmem [resolvable:$true] %s56
      %62 = dma.hbm_to_vmem [thread:$0]  %s5, 256, %s57, [#allocation6], 128, 128, 8
    $region25: #{tpu_custom_call.1} parent=1 // pred_fallthru
      _
    // Predicated region
    $region26: #{tpu_custom_call.1} parent=1 // pred_check
      _
    $region27: #{tpu_custom_call.1} parent=1 // pred_check_branch
      %64 = sbr.rel (0) target = $region29
    $region28: #{tpu_custom_call.1} parent=1 // pred_region
      %s66 = ssub.s32 64, 64
      %67 = vsyncadd [#allocation9], %s66
      %s69 = sshll.u32 [#allocation8], 4
      %s70 = int_to_ptr.vmem [resolvable:$true] %s69
      %72 = dma.hbm_to_vmem [thread:$0]  %s6, 64, %s70, [#allocation9]
    $region29: #{tpu_custom_call.1} parent=1 // pred_fallthru
      _
    // Predicated region
    $region30: #{tpu_custom_call.1} parent=1 // pred_check
      _
    $region31: #{tpu_custom_call.1} parent=1 // pred_check_branch
      %74 = sbr.rel (0) target = $region33
    $region32: #{tpu_custom_call.1} parent=1 // pred_region
      %s76 = ssub.s32 64, 64
      %77 = vsyncadd [#allocation9], %s76
      %s79 = sshll.u32 [#allocation10], 4
      %s80 = int_to_ptr.vmem [resolvable:$true] %s79
      %82 = dma.hbm_to_vmem [thread:$0]  %s7, 64, %s80, [#allocation9]
    $region33: #{tpu_custom_call.1} parent=1 // pred_fallthru
      _
    // Predicated region
    $region34: #{tpu_custom_call.1} parent=1 // pred_check
      _
    $region35: #{tpu_custom_call.1} parent=1 // pred_check_branch
      %84 = sbr.rel (0) target = $region37
    $region36: #{tpu_custom_call.1} parent=1 // pred_region
      %s86 = ssub.s32 16, 16
      %87 = vsyncadd [#allocation12], %s86
      %s89 = sshll.u32 [#allocation11], 4
      %s90 = int_to_ptr.vmem [resolvable:$true] %s89
      %92 = dma.hbm_to_vmem [thread:$0]  %s8, 16, %s90, [#allocation12]
    $region37: #{tpu_custom_call.1} parent=1 // pred_fallthru
      _
    // Predicated region
    $region38: #{tpu_custom_call.1} parent=1 // pred_check
      _
    $region39: #{tpu_custom_call.1} parent=1 // pred_check_branch
      %94 = sbr.rel (0) target = $region41
    $region40: #{tpu_custom_call.1} parent=1 // pred_region
      _
    $region41: #{tpu_custom_call.1} parent=1 // pred_fallthru
      _
    // Predicated region
    $region42: #{tpu_custom_call.1} parent=1 // pred_check
      _
    $region43: #{tpu_custom_call.1} parent=1 // pred_check_branch
      %96 = sbr.rel (0) target = $region45
    $region44: #{tpu_custom_call.1} parent=1 // pred_region
      _
    $region45: #{tpu_custom_call.1} parent=1 // pred_fallthru
      _
    // Predicated region
    $region46: #{tpu_custom_call.1} parent=1 // pred_check
      _
    $region47: #{tpu_custom_call.1} parent=1 // pred_check_branch
      %98 = sbr.rel (0) target = $region49
    $region48: #{tpu_custom_call.1} parent=1 // pred_region
      %s100 = ssub.s32 512, 512
      %101 = vsyncadd [#allocation12], %s100
      %s102 = sshll.u32 [#allocation13], 4
      %s103 = int_to_ptr.vmem [resolvable:$true] %s102
      %108 = dma.hbm_to_vmem [thread:$0]  %s11, 512, %s103, [#allocation12], 128, 128, 8
    $region49: #{tpu_custom_call.1} parent=1 // pred_fallthru
      _
    // Predicated region
    $region50: #{tpu_custom_call.1} parent=1 // pred_check
      _
    $region51: #{tpu_custom_call.1} parent=1 // pred_check_branch
      %110 = sbr.rel (0) target = $region53
    $region52: #{tpu_custom_call.1} parent=1 // pred_region
      _
    $region53: #{tpu_custom_call.1} parent=1 // pred_fallthru
      _
    // Predicated region
    $region54: #{tpu_custom_call.1} parent=1 // pred_check
      _
    $region55: #{tpu_custom_call.1} parent=1 // pred_check_branch
      %112 = sbr.rel (0) target = $region57
    $region56: #{tpu_custom_call.1} parent=1 // pred_region
      %113 = dma.done [#allocation3], 128
    $region57: #{tpu_custom_call.1} parent=1 // pred_fallthru
      _
    // Predicated region
    $region58: #{tpu_custom_call.1} parent=1 // pred_check
      _
    $region59: #{tpu_custom_call.1} parent=1 // pred_check_branch
      %115 = sbr.rel (0) target = $region61
    $region60: #{tpu_custom_call.1} parent=1 // pred_region
      %116 = dma.done [#allocation6], 256
    $region61: #{tpu_custom_call.1} parent=1 // pred_fallthru
      _
    // Predicated region
    $region62: #{tpu_custom_call.1} parent=1 // pred_check
      _
    $region63: #{tpu_custom_call.1} parent=1 // pred_check_branch
      %118 = sbr.rel (0) target = $region65
    $region64: #{tpu_custom_call.1} parent=1 // pred_region
      %119 = dma.done [#allocation6], 256
    $region65: #{tpu_custom_call.1} parent=1 // pred_fallthru
      _
    // Predicated region
    $region66: #{tpu_custom_call.1} parent=1 // pred_check
      _
    $region67: #{tpu_custom_call.1} parent=1 // pred_check_branch
      %121 = sbr.rel (0) target = $region69
    $region68: #{tpu_custom_call.1} parent=1 // pred_region
      %122 = dma.done [#allocation9], 64
    $region69: #{tpu_custom_call.1} parent=1 // pred_fallthru
      _
    // Predicated region
    $region70: #{tpu_custom_call.1} parent=1 // pred_check
      _
    $region71: #{tpu_custom_call.1} parent=1 // pred_check_branch
      %124 = sbr.rel (0) target = $region73
    $region72: #{tpu_custom_call.1} parent=1 // pred_region
      %125 = dma.done [#allocation9], 64
    $region73: #{tpu_custom_call.1} parent=1 // pred_fallthru
      _
    // Predicated region
    $region74: #{tpu_custom_call.1} parent=1 // pred_check
      _
    $region75: #{tpu_custom_call.1} parent=1 // pred_check_branch
      %127 = sbr.rel (0) target = $region77
    $region76: #{tpu_custom_call.1} parent=1 // pred_region
      %128 = dma.done [#allocation12], 16
    $region77: #{tpu_custom_call.1} parent=1 // pred_fallthru
      _
    // Predicated region
    $region78: #{tpu_custom_call.1} parent=1 // pred_check
      _
    $region79: #{tpu_custom_call.1} parent=1 // pred_check_branch
      %130 = sbr.rel (0) target = $region81
    $region80: #{tpu_custom_call.1} parent=1 // pred_region
      %131 = dma.done [#allocation12], 512
    $region81: #{tpu_custom_call.1} parent=1 // pred_fallthru
      _
    %v132 = vld [vmem:[%s0] sm:$0xff]
    %v133 = vld [vmem:[#allocation5] sm:$0xff]
    %v134 = vld [vmem:[#allocation5 + $0x8] sm:$0x3]
    %v135 = vld [vmem:[#allocation2] sm:$0xff]
    %v136 = vld [vmem:[#allocation7] sm:$0xff]
    %v137 = vld [vmem:[#allocation7 + $0x8] sm:$0xf]
    %vm138 = vcmask 97280
    %v140 = vsel %vm138, %v135, 0
    %vm142 = vcmask 1043456
    %v144 = vsel %vm142, %v137, 0
    %146 = vmatprep.subr.mxu0 0.0
    %147 = vmatpush1.msra.mxu0 0.0
    %148 = vmatprep.subr.mxu0 0.0
    %149 = vmatpush1.msra.mxu0 0.0
    %150 = vmatprep.subr.mxu0 0.0
    %151 = vmatpush1.msra.mxu0 0.0
    %152 = vmatprep.subr.mxu0 0.0
    %153 = vmatpush1.msra.mxu0 0.0
    %154 = vmatprep.subr.mxu0 0.0
    %155 = vmatpush1.msra.mxu0 0.0
    %156 = vmatprep.subr.mxu0 0.0
    %157 = vmatpush1.msra.mxu0 0.0
    %158 = vmatprep.subr.mxu0 0.0
    %159 = vmatpush1.msra.mxu0 0.0
    %160 = vmatprep.subr.mxu0 0.0
    %161 = vmatpush1.msra.mxu0 0.0
    %162 = vmatprep.subr.mxu0 0.0
    %163 = vmatpush1.msra.mxu0 0.0
    %164 = vmatprep.subr.mxu0 0.0
    %165 = vmatpush1.msra.mxu0 0.0
    %166 = vmatprep.subr.mxu0 0.0
    %167 = vmatpush1.msra.mxu0 0.0
    %168 = vmatprep.subr.mxu0 0.0
    %169 = vmatpush1.msra.mxu0 0.0
    %170 = vmatprep.subr.mxu0 0.0
    %171 = vmatpush1.msra.mxu0 0.0
    %172 = vmatprep.subr.mxu0 0.0
    %173 = vmatpush1.msra.mxu0 0.0
    %174 = vmatprep.subr.mxu0 0.0
    %175 = vmatpush1.msra.mxu0 %v144
    %176 = vmatprep.subr.mxu0 0.0
    %177 = vmatpush1.msra.mxu0 %v136
    %178 = vmatprep.subr.mxu0 0.0
    %179 = vmatpush2.msra.mxu0 0.0
    %180 = vmatprep.subr.mxu0 0.0
    %181 = vmatpush2.msra.mxu0 0.0
    %182 = vmatprep.subr.mxu0 0.0
    %183 = vmatpush2.msra.mxu0 0.0
    %184 = vmatprep.subr.mxu0 0.0
    %185 = vmatpush2.msra.mxu0 0.0
    %186 = vmatprep.subr.mxu0 0.0
    %187 = vmatpush2.msra.mxu0 0.0
    %188 = vmatprep.subr.mxu0 0.0
    %189 = vmatpush2.msra.mxu0 0.0
    %190 = vmatprep.subr.mxu0 0.0
    %191 = vmatpush2.msra.mxu0 0.0
    %192 = vmatprep.subr.mxu0 0.0
    %193 = vmatpush2.msra.mxu0 0.0
    %194 = vmatprep.subr.mxu0 0.0
    %195 = vmatpush2.msra.mxu0 0.0
    %196 = vmatprep.subr.mxu0 0.0
    %197 = vmatpush2.msra.mxu0 0.0
    %198 = vmatprep.subr.mxu0 0.0
    %199 = vmatpush2.msra.mxu0 0.0
    %200 = vmatprep.subr.mxu0 0.0
    %201 = vmatpush2.msra.mxu0 0.0
    %202 = vmatprep.subr.mxu0 0.0
    %203 = vmatpush2.msra.mxu0 0.0
    %204 = vmatprep.subr.mxu0 0.0
    %205 = vmatpush2.msra.mxu0 0.0
    %206 = vmatprep.subr.mxu0 0.0
    %207 = vmatpush2.msra.mxu0 0.0
    %208 = vmatprep.subr.mxu0 0.0
    %209 = vmatpush2.msra.mxu0 0.0
    %210 = vmatprep.mubr.f32.mxu0 0.0
    %211 = vmatmul.mubr.f32.gmra.mxu0 %v140
    %v212 = vpop.f32.mrf.mxu0
    %v213 = vadd.f32 0.0, %v212
    %v214 = vpop.f32.mrf.mxu0
    %215 = vdwg.mxu0
    %vm216 = vcmask 80896
    %v218 = vsel %vm216, %v132, 0
    %vm220 = vcmask 1041408
    %v222 = vsel %vm220, %v134, 0
    %224 = vmatprep.subr.mxu0 0.0
    %225 = vmatpush1.msra.mxu0 0.0
    %226 = vmatprep.subr.mxu0 0.0
    %227 = vmatpush1.msra.mxu0 0.0
    %228 = vmatprep.subr.mxu0 0.0
    %229 = vmatpush1.msra.mxu0 0.0
    %230 = vmatprep.subr.mxu0 0.0
    %231 = vmatpush1.msra.mxu0 0.0
    %232 = vmatprep.subr.mxu0 0.0
    %233 = vmatpush1.msra.mxu0 0.0
    %234 = vmatprep.subr.mxu0 0.0
    %235 = vmatpush1.msra.mxu0 0.0
    %236 = vmatprep.subr.mxu0 0.0
    %237 = vmatpush1.msra.mxu0 0.0
    %238 = vmatprep.subr.mxu0 0.0
    %239 = vmatpush1.msra.mxu0 0.0
    %240 = vmatprep.subr.mxu0 0.0
    %241 = vmatpush1.msra.mxu0 0.0
    %242 = vmatprep.subr.mxu0 0.0
    %243 = vmatpush1.msra.mxu0 0.0
    %244 = vmatprep.subr.mxu0 0.0
    %245 = vmatpush1.msra.mxu0 0.0
    %246 = vmatprep.subr.mxu0 0.0
    %247 = vmatpush1.msra.mxu0 0.0
    %248 = vmatprep.subr.mxu0 0.0
    %249 = vmatpush1.msra.mxu0 0.0
    %250 = vmatprep.subr.mxu0 0.0
    %251 = vmatpush1.msra.mxu0 0.0
    %252 = vmatprep.subr.mxu0 0.0
    %253 = vmatpush1.msra.mxu0 %v222
    %254 = vmatprep.subr.mxu0 0.0
    %255 = vmatpush1.msra.mxu0 %v133
    %256 = vmatprep.subr.mxu0 0.0
    %257 = vmatpush2.msra.mxu0 0.0
    %258 = vmatprep.subr.mxu0 0.0
    %259 = vmatpush2.msra.mxu0 0.0
    %260 = vmatprep.subr.mxu0 0.0
    %261 = vmatpush2.msra.mxu0 0.0
    %262 = vmatprep.subr.mxu0 0.0
    %263 = vmatpush2.msra.mxu0 0.0
    %264 = vmatprep.subr.mxu0 0.0
    %265 = vmatpush2.msra.mxu0 0.0
    %266 = vmatprep.subr.mxu0 0.0
    %267 = vmatpush2.msra.mxu0 0.0
    %268 = vmatprep.subr.mxu0 0.0
    %269 = vmatpush2.msra.mxu0 0.0
    %270 = vmatprep.subr.mxu0 0.0
    %271 = vmatpush2.msra.mxu0 0.0
    %272 = vmatprep.subr.mxu0 0.0
    %273 = vmatpush2.msra.mxu0 0.0
    %274 = vmatprep.subr.mxu0 0.0
    %275 = vmatpush2.msra.mxu0 0.0
    %276 = vmatprep.subr.mxu0 0.0
    %277 = vmatpush2.msra.mxu0 0.0
    %278 = vmatprep.subr.mxu0 0.0
    %279 = vmatpush2.msra.mxu0 0.0
    %280 = vmatprep.subr.mxu0 0.0
    %281 = vmatpush2.msra.mxu0 0.0
    %282 = vmatprep.subr.mxu0 0.0
    %283 = vmatpush2.msra.mxu0 0.0
    %284 = vmatprep.subr.mxu0 0.0
    %285 = vmatpush2.msra.mxu0 0.0
    %286 = vmatprep.subr.mxu0 0.0
    %287 = vmatpush2.msra.mxu0 0.0
    %288 = vmatprep.mubr.f32.mxu0 0.0
    %289 = vmatmul.mubr.f32.gmra.mxu0 %v218
    %v290 = vpop.f32.mrf.mxu0
    %v291 = vadd.f32 %v213, %v290
    %v292 = vpop.f32.mrf.mxu0
    %293 = vdwg.mxu0
    %v294 = vld [vmem:[%s2] sm:$0xff]
    %v295 = vld [vmem:[#allocation8] sm:$0xf]
    %vm296 = vcmask 31744
    %v298 = vsel %vm296, %v294, 0
    %v301 = vsel %vm142, %v295, 0
    %303 = vmatprep.subr.mxu0 0.0
    %304 = vmatpush1.msra.mxu0 0.0
    %305 = vmatprep.subr.mxu0 0.0
    %306 = vmatpush1.msra.mxu0 0.0
    %307 = vmatprep.subr.mxu0 0.0
    %308 = vmatpush1.msra.mxu0 0.0
    %309 = vmatprep.subr.mxu0 0.0
    %310 = vmatpush1.msra.mxu0 0.0
    %311 = vmatprep.subr.mxu0 0.0
    %312 = vmatpush1.msra.mxu0 0.0
    %313 = vmatprep.subr.mxu0 0.0
    %314 = vmatpush1.msra.mxu0 0.0
    %315 = vmatprep.subr.mxu0 0.0
    %316 = vmatpush1.msra.mxu0 0.0
    %317 = vmatprep.subr.mxu0 0.0
    %318 = vmatpush1.msra.mxu0 0.0
    %319 = vmatprep.subr.mxu0 0.0
    %320 = vmatpush1.msra.mxu0 0.0
    %321 = vmatprep.subr.mxu0 0.0
    %322 = vmatpush1.msra.mxu0 0.0
    %323 = vmatprep.subr.mxu0 0.0
    %324 = vmatpush1.msra.mxu0 0.0
    %325 = vmatprep.subr.mxu0 0.0
    %326 = vmatpush1.msra.mxu0 0.0
    %327 = vmatprep.subr.mxu0 0.0
    %328 = vmatpush1.msra.mxu0 0.0
    %329 = vmatprep.subr.mxu0 0.0
    %330 = vmatpush1.msra.mxu0 0.0
    %331 = vmatprep.subr.mxu0 0.0
    %332 = vmatpush1.msra.mxu0 0.0
    %333 = vmatprep.subr.mxu0 0.0
    %334 = vmatpush1.msra.mxu0 %v301
    %335 = vmatprep.subr.mxu0 0.0
    %336 = vmatpush2.msra.mxu0 0.0
    %337 = vmatprep.subr.mxu0 0.0
    %338 = vmatpush2.msra.mxu0 0.0
    %339 = vmatprep.subr.mxu0 0.0
    %340 = vmatpush2.msra.mxu0 0.0
    %341 = vmatprep.subr.mxu0 0.0
    %342 = vmatpush2.msra.mxu0 0.0
    %343 = vmatprep.subr.mxu0 0.0
    %344 = vmatpush2.msra.mxu0 0.0
    %345 = vmatprep.subr.mxu0 0.0
    %346 = vmatpush2.msra.mxu0 0.0
    %347 = vmatprep.subr.mxu0 0.0
    %348 = vmatpush2.msra.mxu0 0.0
    %349 = vmatprep.subr.mxu0 0.0
    %350 = vmatpush2.msra.mxu0 0.0
    %351 = vmatprep.subr.mxu0 0.0
    %352 = vmatpush2.msra.mxu0 0.0
    %353 = vmatprep.subr.mxu0 0.0
    %354 = vmatpush2.msra.mxu0 0.0
    %355 = vmatprep.subr.mxu0 0.0
    %356 = vmatpush2.msra.mxu0 0.0
    %357 = vmatprep.subr.mxu0 0.0
    %358 = vmatpush2.msra.mxu0 0.0
    %359 = vmatprep.subr.mxu0 0.0
    %360 = vmatpush2.msra.mxu0 0.0
    %361 = vmatprep.subr.mxu0 0.0
    %362 = vmatpush2.msra.mxu0 0.0
    %363 = vmatprep.subr.mxu0 0.0
    %364 = vmatpush2.msra.mxu0 0.0
    %365 = vmatprep.subr.mxu0 0.0
    %366 = vmatpush2.msra.mxu0 0.0
    %367 = vmatprep.mubr.f32.mxu0 0.0
    %368 = vmatmul.mubr.f32.gmra.mxu0 %v298
    %v369 = vpop.f32.mrf.mxu0
    %v370 = vadd.f32 0.0, %v369
    %v371 = vpop.f32.mrf.mxu0
    %372 = vdwg.mxu0
    %v373 = vadd.f32 %v291, %v370
    %v374 = vld [vmem:[%s3] sm:$0xff]
    %v375 = vld [vmem:[#allocation10] sm:$0x7]
    %vm376 = vcmask 23552
    %v378 = vsel %vm376, %v374, 0
    %vm380 = vcmask 1042432
    %v382 = vsel %vm380, %v375, 0
    %384 = vmatprep.subr.mxu0 0.0
    %385 = vmatpush1.msra.mxu0 0.0
    %386 = vmatprep.subr.mxu0 0.0
    %387 = vmatpush1.msra.mxu0 0.0
    %388 = vmatprep.subr.mxu0 0.0
    %389 = vmatpush1.msra.mxu0 0.0
    %390 = vmatprep.subr.mxu0 0.0
    %391 = vmatpush1.msra.mxu0 0.0
    %392 = vmatprep.subr.mxu0 0.0
    %393 = vmatpush1.msra.mxu0 0.0
    %394 = vmatprep.subr.mxu0 0.0
    %395 = vmatpush1.msra.mxu0 0.0
    %396 = vmatprep.subr.mxu0 0.0
    %397 = vmatpush1.msra.mxu0 0.0
    %398 = vmatprep.subr.mxu0 0.0
    %399 = vmatpush1.msra.mxu0 0.0
    %400 = vmatprep.subr.mxu0 0.0
    %401 = vmatpush1.msra.mxu0 0.0
    %402 = vmatprep.subr.mxu0 0.0
    %403 = vmatpush1.msra.mxu0 0.0
    %404 = vmatprep.subr.mxu0 0.0
    %405 = vmatpush1.msra.mxu0 0.0
    %406 = vmatprep.subr.mxu0 0.0
    %407 = vmatpush1.msra.mxu0 0.0
    %408 = vmatprep.subr.mxu0 0.0
    %409 = vmatpush1.msra.mxu0 0.0
    %410 = vmatprep.subr.mxu0 0.0
    %411 = vmatpush1.msra.mxu0 0.0
    %412 = vmatprep.subr.mxu0 0.0
    %413 = vmatpush1.msra.mxu0 0.0
    %414 = vmatprep.subr.mxu0 0.0
    %415 = vmatpush1.msra.mxu0 %v382
    %416 = vmatprep.subr.mxu0 0.0
    %417 = vmatpush2.msra.mxu0 0.0
    %418 = vmatprep.subr.mxu0 0.0
    %419 = vmatpush2.msra.mxu0 0.0
    %420 = vmatprep.subr.mxu0 0.0
    %421 = vmatpush2.msra.mxu0 0.0
    %422 = vmatprep.subr.mxu0 0.0
    %423 = vmatpush2.msra.mxu0 0.0
    %424 = vmatprep.subr.mxu0 0.0
    %425 = vmatpush2.msra.mxu0 0.0
    %426 = vmatprep.subr.mxu0 0.0
    %427 = vmatpush2.msra.mxu0 0.0
    %428 = vmatprep.subr.mxu0 0.0
    %429 = vmatpush2.msra.mxu0 0.0
    %430 = vmatprep.subr.mxu0 0.0
    %431 = vmatpush2.msra.mxu0 0.0
    %432 = vmatprep.subr.mxu0 0.0
    %433 = vmatpush2.msra.mxu0 0.0
    %434 = vmatprep.subr.mxu0 0.0
    %435 = vmatpush2.msra.mxu0 0.0
    %436 = vmatprep.subr.mxu0 0.0
    %437 = vmatpush2.msra.mxu0 0.0
    %438 = vmatprep.subr.mxu0 0.0
    %439 = vmatpush2.msra.mxu0 0.0
    %440 = vmatprep.subr.mxu0 0.0
    %441 = vmatpush2.msra.mxu0 0.0
    %442 = vmatprep.subr.mxu0 0.0
    %443 = vmatpush2.msra.mxu0 0.0
    %444 = vmatprep.subr.mxu0 0.0
    %445 = vmatpush2.msra.mxu0 0.0
    %446 = vmatprep.subr.mxu0 0.0
    %447 = vmatpush2.msra.mxu0 0.0
    %448 = vmatprep.mubr.f32.mxu0 0.0
    %449 = vmatmul.mubr.f32.gmra.mxu0 %v378
    %v450 = vpop.f32.mrf.mxu0
    %v451 = vadd.f32 0.0, %v450
    %v452 = vpop.f32.mrf.mxu0
    %453 = vdwg.mxu0
    %v454 = vadd.f32 %v373, %v451
    %v455 = vld [vmem:[#allocation11] sm:$0x1]
    %v457 = vlaneseq
    %v458 = vshrl.u32 %v457, 7
    %v459 = vsub.s32 0, %v458
    %v460 = vrot.slane %v455, %v459
    %v462 = vadd.f32 %v454, %v460
    %v463 = vmax.f32 %v462, 0.0
    %v464 = vld [vmem:[%s9] sm:$0xff]
    %v465 = vld [vmem:[%s9 + $0x8] sm:$0xff]
    %v466 = vld [vmem:[%s9 + $0x10] sm:$0xff]
    %v467 = vld [vmem:[%s9 + $0x18] sm:$0xff]
    %v468 = vld [vmem:[%s10] sm:$0x1]
    %v470 = vlaneseq
    %v471 = vshrl.u32 %v470, 7
    %v472 = vsub.s32 0, %v471
    %v473 = vrot.slane %v468, %v472
    %vm475 = vcmask 261120
    %v477 = vsel %vm475, %v463, 0
    %479 = vmatprep.subr.mxu0 0.0
    %480 = vmatpush1.msra.mxu0 0.0
    %481 = vmatprep.subr.mxu0 0.0
    %482 = vmatpush1.msra.mxu0 0.0
    %483 = vmatprep.subr.mxu0 0.0
    %484 = vmatpush1.msra.mxu0 0.0
    %485 = vmatprep.subr.mxu0 0.0
    %486 = vmatpush1.msra.mxu0 0.0
    %487 = vmatprep.subr.mxu0 0.0
    %488 = vmatpush1.msra.mxu0 0.0
    %489 = vmatprep.subr.mxu0 0.0
    %490 = vmatpush1.msra.mxu0 0.0
    %491 = vmatprep.subr.mxu0 0.0
    %492 = vmatpush1.msra.mxu0 0.0
    %493 = vmatprep.subr.mxu0 0.0
    %494 = vmatpush1.msra.mxu0 0.0
    %495 = vmatprep.subr.mxu0 0.0
    %496 = vmatpush1.msra.mxu0 0.0
    %497 = vmatprep.subr.mxu0 0.0
    %498 = vmatpush1.msra.mxu0 0.0
    %499 = vmatprep.subr.mxu0 0.0
    %500 = vmatpush1.msra.mxu0 0.0
    %501 = vmatprep.subr.mxu0 0.0
    %502 = vmatpush1.msra.mxu0 0.0
    %503 = vmatprep.subr.mxu0 0.0
    %504 = vmatpush1.msra.mxu0 %v467
    %505 = vmatprep.subr.mxu0 0.0
    %506 = vmatpush1.msra.mxu0 %v466
    %507 = vmatprep.subr.mxu0 0.0
    %508 = vmatpush1.msra.mxu0 %v465
    %509 = vmatprep.subr.mxu0 0.0
    %510 = vmatpush1.msra.mxu0 %v464
    %511 = vmatprep.subr.mxu0 0.0
    %512 = vmatpush2.msra.mxu0 0.0
    %513 = vmatprep.subr.mxu0 0.0
    %514 = vmatpush2.msra.mxu0 0.0
    %515 = vmatprep.subr.mxu0 0.0
    %516 = vmatpush2.msra.mxu0 0.0
    %517 = vmatprep.subr.mxu0 0.0
    %518 = vmatpush2.msra.mxu0 0.0
    %519 = vmatprep.subr.mxu0 0.0
    %520 = vmatpush2.msra.mxu0 0.0
    %521 = vmatprep.subr.mxu0 0.0
    %522 = vmatpush2.msra.mxu0 0.0
    %523 = vmatprep.subr.mxu0 0.0
    %524 = vmatpush2.msra.mxu0 0.0
    %525 = vmatprep.subr.mxu0 0.0
    %526 = vmatpush2.msra.mxu0 0.0
    %527 = vmatprep.subr.mxu0 0.0
    %528 = vmatpush2.msra.mxu0 0.0
    %529 = vmatprep.subr.mxu0 0.0
    %530 = vmatpush2.msra.mxu0 0.0
    %531 = vmatprep.subr.mxu0 0.0
    %532 = vmatpush2.msra.mxu0 0.0
    %533 = vmatprep.subr.mxu0 0.0
    %534 = vmatpush2.msra.mxu0 0.0
    %535 = vmatprep.subr.mxu0 0.0
    %536 = vmatpush2.msra.mxu0 0.0
    %537 = vmatprep.subr.mxu0 0.0
    %538 = vmatpush2.msra.mxu0 0.0
    %539 = vmatprep.subr.mxu0 0.0
    %540 = vmatpush2.msra.mxu0 0.0
    %541 = vmatprep.subr.mxu0 0.0
    %542 = vmatpush2.msra.mxu0 0.0
    %543 = vmatprep.mubr.f32.mxu0 0.0
    %544 = vmatmul.mubr.f32.gmra.mxu0 %v477
    %v545 = vpop.f32.mrf.mxu0
    %v546 = vadd.f32 %v473, %v545
    %v547 = vpop.f32.mrf.mxu0
    %548 = vdwg.mxu0
    %v549 = vmax.f32 %v546, 0.0
    %v550 = vld [vmem:[#allocation13] sm:$0xff]
    %v551 = vld [vmem:[#allocation13 + $0x8] sm:$0xff]
    %v552 = vld [vmem:[#allocation13 + $0x10] sm:$0xff]
    %v553 = vld [vmem:[#allocation13 + $0x18] sm:$0xff]
    %v554 = vld [vmem:[%s12] sm:$0x1]
    %v556 = vlaneseq
    %v557 = vshrl.u32 %v556, 7
    %v558 = vsub.s32 0, %v557
    %v559 = vrot.slane %v554, %v558
    %v562 = vsel %vm475, %v549, 0
    %564 = vmatprep.subr.mxu0 0.0
    %565 = vmatpush1.msra.mxu0 0.0
    %566 = vmatprep.subr.mxu0 0.0
    %567 = vmatpush1.msra.mxu0 0.0
    %568 = vmatprep.subr.mxu0 0.0
    %569 = vmatpush1.msra.mxu0 0.0
    %570 = vmatprep.subr.mxu0 0.0
    %571 = vmatpush1.msra.mxu0 0.0
    %572 = vmatprep.subr.mxu0 0.0
    %573 = vmatpush1.msra.mxu0 0.0
    %574 = vmatprep.subr.mxu0 0.0
    %575 = vmatpush1.msra.mxu0 0.0
    %576 = vmatprep.subr.mxu0 0.0
    %577 = vmatpush1.msra.mxu0 0.0
    %578 = vmatprep.subr.mxu0 0.0
    %579 = vmatpush1.msra.mxu0 0.0
    %580 = vmatprep.subr.mxu0 0.0
    %581 = vmatpush1.msra.mxu0 0.0
    %582 = vmatprep.subr.mxu0 0.0
    %583 = vmatpush1.msra.mxu0 0.0
    %584 = vmatprep.subr.mxu0 0.0
    %585 = vmatpush1.msra.mxu0 0.0
    %586 = vmatprep.subr.mxu0 0.0
    %587 = vmatpush1.msra.mxu0 0.0
    %588 = vmatprep.subr.mxu0 0.0
    %589 = vmatpush1.msra.mxu0 %v553
    %590 = vmatprep.subr.mxu0 0.0
    %591 = vmatpush1.msra.mxu0 %v552
    %592 = vmatprep.subr.mxu0 0.0
    %593 = vmatpush1.msra.mxu0 %v551
    %594 = vmatprep.subr.mxu0 0.0
    %595 = vmatpush1.msra.mxu0 %v550
    %596 = vmatprep.subr.mxu0 0.0
    %597 = vmatpush2.msra.mxu0 0.0
    %598 = vmatprep.subr.mxu0 0.0
    %599 = vmatpush2.msra.mxu0 0.0
    %600 = vmatprep.subr.mxu0 0.0
    %601 = vmatpush2.msra.mxu0 0.0
    %602 = vmatprep.subr.mxu0 0.0
    %603 = vmatpush2.msra.mxu0 0.0
    %604 = vmatprep.subr.mxu0 0.0
    %605 = vmatpush2.msra.mxu0 0.0
    %606 = vmatprep.subr.mxu0 0.0
    %607 = vmatpush2.msra.mxu0 0.0
    %608 = vmatprep.subr.mxu0 0.0
    %609 = vmatpush2.msra.mxu0 0.0
    %610 = vmatprep.subr.mxu0 0.0
    %611 = vmatpush2.msra.mxu0 0.0
    %612 = vmatprep.subr.mxu0 0.0
    %613 = vmatpush2.msra.mxu0 0.0
    %614 = vmatprep.subr.mxu0 0.0
    %615 = vmatpush2.msra.mxu0 0.0
    %616 = vmatprep.subr.mxu0 0.0
    %617 = vmatpush2.msra.mxu0 0.0
    %618 = vmatprep.subr.mxu0 0.0
    %619 = vmatpush2.msra.mxu0 0.0
    %620 = vmatprep.subr.mxu0 0.0
    %621 = vmatpush2.msra.mxu0 0.0
    %622 = vmatprep.subr.mxu0 0.0
    %623 = vmatpush2.msra.mxu0 0.0
    %624 = vmatprep.subr.mxu0 0.0
    %625 = vmatpush2.msra.mxu0 0.0
    %626 = vmatprep.subr.mxu0 0.0
    %627 = vmatpush2.msra.mxu0 0.0
    %628 = vmatprep.mubr.f32.mxu0 0.0
    %629 = vmatmul.mubr.f32.gmra.mxu0 %v562
    %v630 = vpop.f32.mrf.mxu0
    %v631 = vadd.f32 %v559, %v630
    %v632 = vpop.f32.mrf.mxu0
    %633 = vdwg.mxu0
    %634 = vst [vmem:[#allocation14] sm:$0xff] %v631
    // Predicated region
    $region82: #{tpu_custom_call.1} parent=1 // pred_check
      _
    $region83: #{tpu_custom_call.1} parent=1 // pred_check_branch
      %636 = sbr.rel (0) target = $region85
    $region84: #{tpu_custom_call.1} parent=1 // pred_region
      %s638 = ssub.s32 128, 128
      %639 = vsyncadd [#allocation4], %s638
      %s641 = sshll.u32 [#allocation14], 4
      %s642 = int_to_ptr.vmem [resolvable:$true] %s641
      %644 = dma.vmem_to_hbm [thread:$0]  %s642, 128, %s13, [#allocation4]
    $region85: #{tpu_custom_call.1} parent=1 // pred_fallthru
      _
    // Predicated region
    $region86: #{tpu_custom_call.1} parent=1 // pred_check
      _
    $region87: #{tpu_custom_call.1} parent=1 // pred_check_branch
      %646 = sbr.rel (0) target = $region89
    $region88: #{tpu_custom_call.1} parent=1 // pred_region
      %647 = dma.done [#allocation4], 128
    $region89: #{tpu_custom_call.1} parent=1 // pred_fallthru
      _
    %648 = vsyncpa [#allocation3], 1
    %649 = vsyncpa [#allocation6], 1
    %650 = vsyncpa [#allocation9], 1
    %651 = vsyncpa [#allocation12], 1
    %652 = vsyncpa [#allocation4], 1

</llo_original>
